<compile_context>
chip_gen: v5e
topology: v5e:2x2
jax: 0.10.0
libtpu: 0.0.40
codegen_flags: <defaults>
</compile_context>

<pallas_src>
import jax
import jax.numpy as jnp
from jax.experimental import pallas as pl
from jax.experimental.pallas import tpu as pltpu

_PACK = 4  # logical batch rows packed per 128-lane row (4 * 32 = 128 lanes)


def _round_up(v, m):
    return ((v + m - 1) // m) * m


def _mlp_kernel(x_ref, w1_ref, b1_ref, w2_ref, b2_ref, w3_ref, b3_ref, o_ref):
    # x arrives packed as f32 (tr, 128); cast to bf16 in-kernel (VPU) so the
    # HBM input path is a single f32 read with no wrapper-side cast pass.
    x = x_ref[...].astype(jnp.bfloat16)
    h = jnp.dot(x, w1_ref[...], preferred_element_type=jnp.float32)
    h = jnp.maximum(h + b1_ref[...], 0.0)
    h = jnp.dot(h.astype(jnp.bfloat16), w2_ref[...],
                preferred_element_type=jnp.float32)
    h = jnp.maximum(h + b2_ref[...], 0.0)
    y = jnp.dot(h.astype(jnp.bfloat16), w3_ref[...],
                preferred_element_type=jnp.float32)
    o_ref[...] = (y + b3_ref[...]).astype(o_ref.dtype)


def pack_params(params, pack=_PACK):
    """One-time packing of torch-layout params (W: (out,in)) into
    block-diagonal kron form. Call once at parameter-load time."""
    eye = jnp.eye(pack, dtype=jnp.float32)
    w1 = params["w1"].T.astype(jnp.float32)   # (32, 64)
    w2 = params["w2"].T.astype(jnp.float32)   # (64, 64)
    w3 = params["w3"].T.astype(jnp.float32)   # (64, 16)
    return {
        "w1p": jnp.kron(eye, w1).astype(jnp.bfloat16),   # (128, 256)
        "w2p": jnp.kron(eye, w2).astype(jnp.bfloat16),   # (256, 256)
        "w3p": jnp.kron(eye, w3).astype(jnp.bfloat16),   # (256, 64)
        "b1p": jnp.tile(params["b1"].astype(jnp.float32), pack)[None, :],
        "b2p": jnp.tile(params["b2"].astype(jnp.float32), pack)[None, :],
        "b3p": jnp.tile(params["b3"].astype(jnp.float32), pack)[None, :],
    }


def mlp_forward(x, packed, *, tile_b=32768, num_cores=1):
    """x: (B, 32) float32.  packed: output of pack_params().
    num_cores: pass 2 on megacore chips (v7x) to keep >= 2 grid steps."""
    P = _PACK
    B, D0 = x.shape
    PD0, PD1 = packed["w1p"].shape
    PD2 = packed["w2p"].shape[1]
    PD3 = packed["w3p"].shape[1]
    assert PD0 == P * D0

    # Pad batch only to a multiple of 8 (so the pack/unpack reshapes are exact);
    # the batch-tile remainder is handled by a ragged last grid block.
    B8 = _round_up(B, 8)
    if B8 != B:
        x = jnp.pad(x, ((0, B8 - B), (0, 0)))
    R = B8 // P                               # packed rows
    xp = x.reshape(R, PD0)                    # free row-major re-view, no cast

    # ---- batch-tile selection (in packed rows) ----------------------------
    tr = max(8, tile_b // P)
    if tr >= R:
        tr = R                                # one full block (any R is legal)
    else:
        tr = max(8, (tr // 8) * 8)            # keep (8,128) sublane alignment
    if num_cores > 1 and R > 8:
        steps = -(-R // tr)
        if steps < num_cores:                 # give every TensorCore work
            tr = max(8, _round_up(-(-R // num_cores), 8))
    grid = (pl.cdiv(R, tr),)

    in_specs = [
        pl.BlockSpec((tr, PD0), lambda i: (i, 0)),
        # Weights / biases: constant index_map -> fetched once, never re-DMA'd.
        pl.BlockSpec((PD0, PD1), lambda i: (0, 0)),
        pl.BlockSpec((1, PD1), lambda i: (0, 0)),
        pl.BlockSpec((PD1, PD2), lambda i: (0, 0)),
        pl.BlockSpec((1, PD2), lambda i: (0, 0)),
        pl.BlockSpec((PD2, PD3), lambda i: (0, 0)),
        pl.BlockSpec((1, PD3), lambda i: (0, 0)),
    ]
    out_spec = pl.BlockSpec((tr, PD3), lambda i: (i, 0))

    # Cost estimate reflects the kron-expanded (P x logical) MXU work actually
    # executed and the true bytes moved by the kernel.
    flops = 2 * R * (PD0 * PD1 + PD1 * PD2 + PD2 * PD3)
    bytes_accessed = (
        R * PD0 * 4 + R * PD3 * 4
        + 2 * (packed["w1p"].size + packed["w2p"].size + packed["w3p"].size)
        + 4 * (packed["b1p"].size + packed["b2p"].size + packed["b3p"].size)
    )

    out_p = pl.pallas_call(
        _mlp_kernel,
        out_shape=jax.ShapeDtypeStruct((R, PD3), jnp.float32),
        grid_spec=pltpu.PrefetchScalarGridSpec(
            num_scalar_prefetch=0,
            grid=grid,
            in_specs=in_specs,
            out_specs=out_spec,
        ),
        compiler_params=pltpu.CompilerParams(
            dimension_semantics=("parallel",),
            vmem_limit_bytes=48 * 1024 * 1024,
        ),
        cost_estimate=pl.CostEstimate(
            flops=flops, transcendentals=0, bytes_accessed=bytes_accessed
        ),
    )(xp, packed["w1p"], packed["b1p"], packed["w2p"], packed["b2p"],
      packed["w3p"], packed["b3p"])

    # Undo the lane packing: (R, 4*16) -> (B8, 16); drop the tiny pad rows.
    return out_p.reshape(B8, PD3 // P)[:B]


def init_params(key, layers):
    """Deterministic init matching torch.nn.Linear(in, out) shapes:
    weight (out, in), bias (out,)."""
    ks = jax.random.split(key, 2 * (len(layers) - 1))
    params = {}
    for idx in range(len(layers) - 1):
        fan_in, fan_out = layers[idx], layers[idx + 1]
        bound = 1.0 / jnp.sqrt(fan_in)
        params[f"w{idx + 1}"] = jax.random.uniform(
            ks[2 * idx], (fan_out, fan_in), jnp.float32, -bound, bound
        )
        params[f"b{idx + 1}"] = jax.random.uniform(
            ks[2 * idx + 1], (fan_out,), jnp.float32, -bound, bound
        )
    return params


def reference_forward(x, params):
    h = x @ params["w1"].T + params["b1"]
    h = jnp.maximum(h, 0.0)
    h = h @ params["w2"].T + params["b2"]
    h = jnp.maximum(h, 0.0)
    return h @ params["w3"].T + params["b3"]


if __name__ == "__main__":
    layers = [32, 64, 64, 16]

    key = jax.random.PRNGKey(0)
    kx, kp = jax.random.split(key)
    params = init_params(kp, layers)
    packed = pack_params(params)   # one-time packing (hoisted out of forward)

    # Case 1: small demo batch, single grid step.
    B = 128
    x = jax.random.normal(kx, (B, layers[0]), jnp.float32)
    out = jax.block_until_ready(mlp_forward(x, packed))
    ref = reference_forward(x, params)
    assert out.shape == (B, layers[-1])
    # bf16 MXU operands with f32 accumulation -> relaxed tolerance vs f32 ref.
    assert jnp.allclose(out, ref, atol=5e-2, rtol=5e-2)

    # Case 2: multi-step grid with a ragged last block (no full-array padding).
    B2 = 200
    x2 = jax.random.normal(jax.random.PRNGKey(1), (B2, layers[0]), jnp.float32)
    out2 = jax.block_until_ready(mlp_forward(x2, packed, tile_b=128))
    ref2 = reference_forward(x2, params)
    assert out2.shape == (B2, layers[-1])
    assert jnp.allclose(out2, ref2, atol=5e-2, rtol=5e-2)

    print("KERNEL_OK")
</pallas_src>

<mosaic_0001>
module attributes {stable_mosaic.version = 11 : i64} {
  func.func @_mlp_kernel(%arg0: i32, %arg1: memref<32x128xf32, #tpu.memory_space<vmem>>, %arg2: memref<128x256xbf16, #tpu.memory_space<vmem>>, %arg3: memref<1x256xf32, #tpu.memory_space<vmem>>, %arg4: memref<256x256xbf16, #tpu.memory_space<vmem>>, %arg5: memref<1x256xf32, #tpu.memory_space<vmem>>, %arg6: memref<256x64xbf16, #tpu.memory_space<vmem>>, %arg7: memref<1x64xf32, #tpu.memory_space<vmem>>, %arg8: memref<32x64xf32, #tpu.memory_space<vmem>>) attributes {dimension_semantics = [#tpu.dimension_semantics<parallel>], iteration_bounds = array<i64: 1>, scalar_prefetch = 0 : i64, scratch_operands = 0 : i64, tpu.core_type = #tpu.core_type<tc>, window_params = [{transform_indices = @transform_0, window_bounds = array<i64: 32, 128>}, {pipeline_mode = #tpu.pipeline_mode<synchronous>, transform_indices = @transform_1, window_bounds = array<i64: 128, 256>}, {pipeline_mode = #tpu.pipeline_mode<synchronous>, transform_indices = @transform_2, window_bounds = array<i64: 1, 256>}, {pipeline_mode = #tpu.pipeline_mode<synchronous>, transform_indices = @transform_3, window_bounds = array<i64: 256, 256>}, {pipeline_mode = #tpu.pipeline_mode<synchronous>, transform_indices = @transform_4, window_bounds = array<i64: 1, 256>}, {pipeline_mode = #tpu.pipeline_mode<synchronous>, transform_indices = @transform_5, window_bounds = array<i64: 256, 64>}, {pipeline_mode = #tpu.pipeline_mode<synchronous>, transform_indices = @transform_6, window_bounds = array<i64: 1, 64>}, {transform_indices = @transform_7, window_bounds = array<i64: 32, 64>}]} {
    %c0 = arith.constant 0 : index
    %c0_0 = arith.constant 0 : index
    %0 = vector.load %arg1[%c0, %c0_0] : memref<32x128xf32, #tpu.memory_space<vmem>>, vector<32x128xf32>
    %1 = arith.truncf %0 : vector<32x128xf32> to vector<32x128xbf16>
    %c0_1 = arith.constant 0 : index
    %c0_2 = arith.constant 0 : index
    %2 = vector.load %arg2[%c0_1, %c0_2] : memref<128x256xbf16, #tpu.memory_space<vmem>>, vector<128x256xbf16>
    %cst = arith.constant dense<0.000000e+00> : vector<32x256xf32>
    %3 = tpu.matmul %1, %2, %cst {dimension_numbers = #tpu.dot_dimension_numbers<[1], [0], [0], [1], [0, 0, 1, 1], [], []>} : vector<32x128xbf16>, vector<128x256xbf16>, vector<32x256xf32> -> vector<32x256xf32>
    %c0_3 = arith.constant 0 : index
    %c0_4 = arith.constant 0 : index
    %4 = vector.load %arg3[%c0_3, %c0_4] : memref<1x256xf32, #tpu.memory_space<vmem>>, vector<1x256xf32>
    %5 = vector.broadcast %4 : vector<1x256xf32> to vector<32x256xf32>
    %6 = arith.addf %3, %5 : vector<32x256xf32>
    %cst_5 = arith.constant 0.000000e+00 : f32
    %7 = vector.broadcast %cst_5 : f32 to vector<32x256xf32>
    %8 = arith.maximumf %6, %7 : vector<32x256xf32>
    %9 = arith.truncf %8 : vector<32x256xf32> to vector<32x256xbf16>
    %c0_6 = arith.constant 0 : index
    %c0_7 = arith.constant 0 : index
    %10 = vector.load %arg4[%c0_6, %c0_7] : memref<256x256xbf16, #tpu.memory_space<vmem>>, vector<256x256xbf16>
    %cst_8 = arith.constant dense<0.000000e+00> : vector<32x256xf32>
    %11 = tpu.matmul %9, %10, %cst_8 {dimension_numbers = #tpu.dot_dimension_numbers<[1], [0], [0], [1], [0, 0, 1, 1], [], []>} : vector<32x256xbf16>, vector<256x256xbf16>, vector<32x256xf32> -> vector<32x256xf32>
    %c0_9 = arith.constant 0 : index
    %c0_10 = arith.constant 0 : index
    %12 = vector.load %arg5[%c0_9, %c0_10] : memref<1x256xf32, #tpu.memory_space<vmem>>, vector<1x256xf32>
    %13 = vector.broadcast %12 : vector<1x256xf32> to vector<32x256xf32>
    %14 = arith.addf %11, %13 : vector<32x256xf32>
    %cst_11 = arith.constant 0.000000e+00 : f32
    %15 = vector.broadcast %cst_11 : f32 to vector<32x256xf32>
    %16 = arith.maximumf %14, %15 : vector<32x256xf32>
    %17 = arith.truncf %16 : vector<32x256xf32> to vector<32x256xbf16>
    %c0_12 = arith.constant 0 : index
    %c0_13 = arith.constant 0 : index
    %18 = vector.load %arg6[%c0_12, %c0_13] : memref<256x64xbf16, #tpu.memory_space<vmem>>, vector<256x64xbf16>
    %cst_14 = arith.constant dense<0.000000e+00> : vector<32x64xf32>
    %19 = tpu.matmul %17, %18, %cst_14 {dimension_numbers = #tpu.dot_dimension_numbers<[1], [0], [0], [1], [0, 0, 1, 1], [], []>} : vector<32x256xbf16>, vector<256x64xbf16>, vector<32x64xf32> -> vector<32x64xf32>
    %c0_15 = arith.constant 0 : index
    %c0_16 = arith.constant 0 : index
    %20 = vector.load %arg7[%c0_15, %c0_16] : memref<1x64xf32, #tpu.memory_space<vmem>>, vector<1x64xf32>
    %21 = vector.broadcast %20 : vector<1x64xf32> to vector<32x64xf32>
    %22 = arith.addf %19, %21 : vector<32x64xf32>
    %c0_17 = arith.constant 0 : index
    %c0_18 = arith.constant 0 : index
    %23 = vector.load %arg8[%c0_17, %c0_18] : memref<32x64xf32, #tpu.memory_space<vmem>>, vector<32x64xf32>
    tpu.vector_store %arg8[%c0_17, %c0_18], %22 {strides = array<i32>} : memref<32x64xf32, #tpu.memory_space<vmem>>, vector<32x64xf32>,
    return
  }
  func.func @transform_0(%arg0: i32) -> (i32, i32) {
    %c0_i32 = arith.constant 0 : i32
    %c0_i32_0 = arith.constant 0 : i32
    return %arg0, %c0_i32 : i32, i32
  }
  func.func @transform_1(%arg0: i32) -> (i32, i32) {
    %c0_i32 = arith.constant 0 : i32
    %c0_i32_0 = arith.constant 0 : i32
    %c0_i32_1 = arith.constant 0 : i32
    return %c0_i32, %c0_i32_0 : i32, i32
  }
  func.func @transform_2(%arg0: i32) -> (i32, i32) {
    %c0_i32 = arith.constant 0 : i32
    %c0_i32_0 = arith.constant 0 : i32
    %c0_i32_1 = arith.constant 0 : i32
    return %c0_i32, %c0_i32_0 : i32, i32
  }
  func.func @transform_3(%arg0: i32) -> (i32, i32) {
    %c0_i32 = arith.constant 0 : i32
    %c0_i32_0 = arith.constant 0 : i32
    %c0_i32_1 = arith.constant 0 : i32
    return %c0_i32, %c0_i32_0 : i32, i32
  }
  func.func @transform_4(%arg0: i32) -> (i32, i32) {
    %c0_i32 = arith.constant 0 : i32
    %c0_i32_0 = arith.constant 0 : i32
    %c0_i32_1 = arith.constant 0 : i32
    return %c0_i32, %c0_i32_0 : i32, i32
  }
  func.func @transform_5(%arg0: i32) -> (i32, i32) {
    %c0_i32 = arith.constant 0 : i32
    %c0_i32_0 = arith.constant 0 : i32
    %c0_i32_1 = arith.constant 0 : i32
    return %c0_i32, %c0_i32_0 : i32, i32
  }
  func.func @transform_6(%arg0: i32) -> (i32, i32) {
    %c0_i32 = arith.constant 0 : i32
    %c0_i32_0 = arith.constant 0 : i32
    %c0_i32_1 = arith.constant 0 : i32
    return %c0_i32, %c0_i32_0 : i32, i32
  }
  func.func @transform_7(%arg0: i32) -> (i32, i32) {
    %c0_i32 = arith.constant 0 : i32
    %c0_i32_0 = arith.constant 0 : i32
    return %arg0, %c0_i32 : i32, i32
  }
}

</mosaic_0001>

<llo_original>
// kernel: tpu_custom_call.1
$region0: #{tpu_custom_call.1}
  #allocation0 [shape = 'u32[]', space=smem, size = 0x4, offset = 0x4, fixed_abs, tag = 'smem constant byte address 0x4 - core index']
  #allocation1 [shape = 'u32[72,128]{1,0:T(1,128)}', space=vmem, size = 0x9000, scoped, tag = 'internal scratch']
  %s0 = inlined_call_operand.vmem [shape: f32[32,128], index: 0, kind: input, shape index: {}]
  %s1 = inlined_call_operand.vmem [shape: bf16[128,256], index: 1, kind: input, shape index: {}]
  %s2 = inlined_call_operand.vmem [shape: f32[1,256], index: 2, kind: input, shape index: {}]
  %s3 = inlined_call_operand.hbm [shape: bf16[256,256], index: 3, kind: input, shape index: {}]
  %s4 = inlined_call_operand.vmem [shape: f32[1,256], index: 4, kind: input, shape index: {}]
  %s5 = inlined_call_operand.vmem [shape: bf16[256,64], index: 5, kind: input, shape index: {}]
  %s6 = inlined_call_operand.vmem [shape: f32[1,64], index: 6, kind: input, shape index: {}]
  %s7 = inlined_call_operand.hbm [shape: f32[32,64], index: 7, kind: output, shape index: {}]
  %s8 = sld [smem:[#allocation0]]
  $region42: #{tpu_custom_call.1} parent=0
    _
  %s10 = ssub.s32 1, %s8
  %s11 = scalar_select 0, %s10, %s8
  $region1: #{tpu_custom_call.1} parent=0
    #allocation2 [shape = 'u8[131072]{0}', space=vmem, size = 0x20000, scoped, tag = 'input window, operand 3, single buffered']
    #allocation3 [shape = 's32[1]{0}', space=sflag, size = 0x4, scoped, tag = 'scoped memory for tpu_custom_call.1']
    #allocation4 [shape = 's32[1]{0}', space=sflag, size = 0x4, scoped, tag = 'scoped memory for tpu_custom_call.1']
    #allocation5 [shape = 'u8[16384]{0}', space=vmem, size = 0x4000, scoped, tag = 'output window, operand 0, single buffered']
    %12 = vsyncpa [#allocation3], 0
    %13 = vsyncpa [#allocation4], 0
    // Predicated region
    $region2: #{tpu_custom_call.1} parent=1 // pred_check
      _
    $region3: #{tpu_custom_call.1} parent=1 // pred_check_branch
      %15 = sbr.rel (0) target = $region5
    $region4: #{tpu_custom_call.1} parent=1 // pred_region
      _
    $region5: #{tpu_custom_call.1} parent=1 // pred_fallthru
      _
    // Predicated region
    $region6: #{tpu_custom_call.1} parent=1 // pred_check
      _
    $region7: #{tpu_custom_call.1} parent=1 // pred_check_branch
      %17 = sbr.rel (0) target = $region9
    $region8: #{tpu_custom_call.1} parent=1 // pred_region
      _
    $region9: #{tpu_custom_call.1} parent=1 // pred_fallthru
      _
    // Predicated region
    $region10: #{tpu_custom_call.1} parent=1 // pred_check
      _
    $region11: #{tpu_custom_call.1} parent=1 // pred_check_branch
      %19 = sbr.rel (0) target = $region13
    $region12: #{tpu_custom_call.1} parent=1 // pred_region
      _
    $region13: #{tpu_custom_call.1} parent=1 // pred_fallthru
      _
    // Predicated region
    $region14: #{tpu_custom_call.1} parent=1 // pred_check
      _
    $region15: #{tpu_custom_call.1} parent=1 // pred_check_branch
      %21 = sbr.rel (0) target = $region17
    $region16: #{tpu_custom_call.1} parent=1 // pred_region
      %23 = vsyncadd [#allocation3], 0
      %s24 = sshll.u32 %s3, 4
      %s25 = int_to_ptr.hbm [resolvable:$true] %s24
      %s26 = sshll.u32 [#allocation2], 4
      %s27 = int_to_ptr.vmem [resolvable:$true] %s26
      %32 = dma.hbm_to_vmem [thread:$0]  %s25, 4096, %s27, [#allocation3], 128, 128, 8
    $region17: #{tpu_custom_call.1} parent=1 // pred_fallthru
      _
    // Predicated region
    $region18: #{tpu_custom_call.1} parent=1 // pred_check
      _
    $region19: #{tpu_custom_call.1} parent=1 // pred_check_branch
      %34 = sbr.rel (0) target = $region21
    $region20: #{tpu_custom_call.1} parent=1 // pred_region
      _
    $region21: #{tpu_custom_call.1} parent=1 // pred_fallthru
      _
    // Predicated region
    $region22: #{tpu_custom_call.1} parent=1 // pred_check
      _
    $region23: #{tpu_custom_call.1} parent=1 // pred_check_branch
      %36 = sbr.rel (0) target = $region25
    $region24: #{tpu_custom_call.1} parent=1 // pred_region
      _
    $region25: #{tpu_custom_call.1} parent=1 // pred_fallthru
      _
    // Predicated region
    $region26: #{tpu_custom_call.1} parent=1 // pred_check
      _
    $region27: #{tpu_custom_call.1} parent=1 // pred_check_branch
      %38 = sbr.rel (0) target = $region29
    $region28: #{tpu_custom_call.1} parent=1 // pred_region
      _
    $region29: #{tpu_custom_call.1} parent=1 // pred_fallthru
      _
    // Predicated region
    $region30: #{tpu_custom_call.1} parent=1 // pred_check
      _
    $region31: #{tpu_custom_call.1} parent=1 // pred_check_branch
      %40 = sbr.rel (0) target = $region33
    $region32: #{tpu_custom_call.1} parent=1 // pred_region
      %42 = dma.done [#allocation3], 4096
    $region33: #{tpu_custom_call.1} parent=1 // pred_fallthru
      _
    %v43 = vld [vmem:[%s0] sm:$0xff]
    %v44 = vld [vmem:[%s0 + $0x8] sm:$0xff]
    %v45 = vld [vmem:[%s0 + $0x10] sm:$0xff]
    %v46 = vld [vmem:[%s0 + $0x18] sm:$0xff]
    %v47 = vpack.c.bf16 %v44, %v43
    %v48 = vpack.c.bf16 %v46, %v45
    %v49 = vld [vmem:[%s1] sm:$0xff]
    %v50 = vld [vmem:[%s1 + $0x8] sm:$0xff]
    %v51 = vld [vmem:[%s1 + $0x10] sm:$0xff]
    %v52 = vld [vmem:[%s1 + $0x18] sm:$0xff]
    %v53 = vld [vmem:[%s1 + $0x20] sm:$0xff]
    %v54 = vld [vmem:[%s1 + $0x28] sm:$0xff]
    %v55 = vld [vmem:[%s1 + $0x30] sm:$0xff]
    %v56 = vld [vmem:[%s1 + $0x38] sm:$0xff]
    %v57 = vld [vmem:[%s1 + $0x40] sm:$0xff]
    %v58 = vld [vmem:[%s1 + $0x48] sm:$0xff]
    %v59 = vld [vmem:[%s1 + $0x50] sm:$0xff]
    %v60 = vld [vmem:[%s1 + $0x58] sm:$0xff]
    %v61 = vld [vmem:[%s1 + $0x60] sm:$0xff]
    %v62 = vld [vmem:[%s1 + $0x68] sm:$0xff]
    %v63 = vld [vmem:[%s1 + $0x70] sm:$0xff]
    %v64 = vld [vmem:[%s1 + $0x78] sm:$0xff]
    %v65 = vld [vmem:[%s2] sm:$0x3]
    %v67 = vperm.slane %v65, 0
    %v68 = vperm.slane %v65, 1
    %v87 = vunpack.c.l.b16 %v49
    %v88 = vunpack.c.h.b16 %v49
    %v89 = vunpack.c.l.b16 %v50
    %v90 = vunpack.c.h.b16 %v50
    %v91 = vunpack.c.l.b16 %v51
    %v92 = vunpack.c.h.b16 %v51
    %v93 = vunpack.c.l.b16 %v52
    %v94 = vunpack.c.h.b16 %v52
    %v95 = vunpack.c.l.b16 %v53
    %v96 = vunpack.c.h.b16 %v53
    %v97 = vunpack.c.l.b16 %v54
    %v98 = vunpack.c.h.b16 %v54
    %v99 = vunpack.c.l.b16 %v55
    %v100 = vunpack.c.h.b16 %v55
    %v101 = vunpack.c.l.b16 %v56
    %v102 = vunpack.c.h.b16 %v56
    %v103 = vunpack.c.l.b16 %v57
    %v104 = vunpack.c.h.b16 %v57
    %v105 = vunpack.c.l.b16 %v58
    %v106 = vunpack.c.h.b16 %v58
    %v107 = vunpack.c.l.b16 %v59
    %v108 = vunpack.c.h.b16 %v59
    %v109 = vunpack.c.l.b16 %v60
    %v110 = vunpack.c.h.b16 %v60
    %v111 = vunpack.c.l.b16 %v61
    %v112 = vunpack.c.h.b16 %v61
    %v113 = vunpack.c.l.b16 %v62
    %v114 = vunpack.c.h.b16 %v62
    %v115 = vunpack.c.l.b16 %v63
    %v116 = vunpack.c.h.b16 %v63
    %v117 = vunpack.c.l.b16 %v64
    %v118 = vunpack.c.h.b16 %v64
    %v119 = vpack.c.b16 %v89, %v87
    %v120 = vpack.c.b16 %v90, %v88
    %v121 = vpack.c.b16 %v93, %v91
    %v122 = vpack.c.b16 %v94, %v92
    %v123 = vpack.c.b16 %v97, %v95
    %v124 = vpack.c.b16 %v98, %v96
    %v125 = vpack.c.b16 %v101, %v99
    %v126 = vpack.c.b16 %v102, %v100
    %v127 = vpack.c.b16 %v105, %v103
    %v128 = vpack.c.b16 %v106, %v104
    %v129 = vpack.c.b16 %v109, %v107
    %v130 = vpack.c.b16 %v110, %v108
    %v131 = vpack.c.b16 %v113, %v111
    %v132 = vpack.c.b16 %v114, %v112
    %v133 = vpack.c.b16 %v117, %v115
    %v134 = vpack.c.b16 %v118, %v116
    %151 = vmatpush.bf16.msra.mxu0 %v133
    %152 = vmatpush.bf16.msra.mxu0 %v131
    %153 = vmatpush.bf16.msra.mxu0 %v129
    %154 = vmatpush.bf16.msra.mxu0 %v127
    %155 = vmatpush.bf16.msra.mxu0 %v125
    %156 = vmatpush.bf16.msra.mxu0 %v123
    %157 = vmatpush.bf16.msra.mxu0 %v121
    %158 = vmatpush.bf16.msra.mxu0 %v119
    %159 = vmatmul.bf16.gmra.mxu0 %v47
    %v160 = vpop.f32.mrf.mxu0
    %v161 = vadd.f32 %v67, %v160
    %v162 = vpop.f32.mrf.mxu0
    %v163 = vadd.f32 %v67, %v162
    %164 = vmatmul.bf16.gmra.mxu0 %v48
    %v165 = vpop.f32.mrf.mxu0
    %v166 = vadd.f32 %v67, %v165
    %v167 = vpop.f32.mrf.mxu0
    %v168 = vadd.f32 %v67, %v167
    %169 = vdwg.mxu0
    %170 = vmatpush.bf16.msra.mxu0 %v134
    %171 = vmatpush.bf16.msra.mxu0 %v132
    %172 = vmatpush.bf16.msra.mxu0 %v130
    %173 = vmatpush.bf16.msra.mxu0 %v128
    %174 = vmatpush.bf16.msra.mxu0 %v126
    %175 = vmatpush.bf16.msra.mxu0 %v124
    %176 = vmatpush.bf16.msra.mxu0 %v122
    %177 = vmatpush.bf16.msra.mxu0 %v120
    %178 = vmatmul.bf16.gmra.mxu0 %v47
    %v179 = vpop.f32.mrf.mxu0
    %v180 = vadd.f32 %v68, %v179
    %v181 = vpop.f32.mrf.mxu0
    %v182 = vadd.f32 %v68, %v181
    %183 = vmatmul.bf16.gmra.mxu0 %v48
    %v184 = vpop.f32.mrf.mxu0
    %v185 = vadd.f32 %v68, %v184
    %v186 = vpop.f32.mrf.mxu0
    %v187 = vadd.f32 %v68, %v186
    %188 = vdwg.mxu0
    %v189 = vmax.f32 %v161, 0.0
    %v190 = vmax.f32 %v180, 0.0
    %v191 = vmax.f32 %v163, 0.0
    %v192 = vmax.f32 %v182, 0.0
    %v193 = vmax.f32 %v166, 0.0
    %v194 = vmax.f32 %v185, 0.0
    %v195 = vmax.f32 %v168, 0.0
    %v196 = vmax.f32 %v187, 0.0
    %v197 = vpack.c.bf16 %v191, %v189
    %v198 = vpack.c.bf16 %v192, %v190
    %v199 = vpack.c.bf16 %v195, %v193
    %v200 = vpack.c.bf16 %v196, %v194
    %v201 = vld [vmem:[#allocation2] sm:$0xff]
    %v202 = vld [vmem:[#allocation2 + $0x8] sm:$0xff]
    %v203 = vld [vmem:[#allocation2 + $0x10] sm:$0xff]
    %v204 = vld [vmem:[#allocation2 + $0x18] sm:$0xff]
    %v205 = vld [vmem:[#allocation2 + $0x20] sm:$0xff]
    %v206 = vld [vmem:[#allocation2 + $0x28] sm:$0xff]
    %v207 = vld [vmem:[#allocation2 + $0x30] sm:$0xff]
    %v208 = vld [vmem:[#allocation2 + $0x38] sm:$0xff]
    %v209 = vld [vmem:[#allocation2 + $0x40] sm:$0xff]
    %v210 = vld [vmem:[#allocation2 + $0x48] sm:$0xff]
    %v211 = vld [vmem:[#allocation2 + $0x50] sm:$0xff]
    %v212 = vld [vmem:[#allocation2 + $0x58] sm:$0xff]
    %v213 = vld [vmem:[#allocation2 + $0x60] sm:$0xff]
    %v214 = vld [vmem:[#allocation2 + $0x68] sm:$0xff]
    %v215 = vld [vmem:[#allocation2 + $0x70] sm:$0xff]
    %v216 = vld [vmem:[#allocation2 + $0x78] sm:$0xff]
    %v217 = vld [vmem:[#allocation2 + $0x80] sm:$0xff]
    %v218 = vld [vmem:[#allocation2 + $0x88] sm:$0xff]
    %v219 = vld [vmem:[#allocation2 + $0x90] sm:$0xff]
    %v220 = vld [vmem:[#allocation2 + $0x98] sm:$0xff]
    %v221 = vld [vmem:[#allocation2 + $0xa0] sm:$0xff]
    %v222 = vld [vmem:[#allocation2 + $0xa8] sm:$0xff]
    %v223 = vld [vmem:[#allocation2 + $0xb0] sm:$0xff]
    %v224 = vld [vmem:[#allocation2 + $0xb8] sm:$0xff]
    %v225 = vld [vmem:[#allocation2 + $0xc0] sm:$0xff]
    %v226 = vld [vmem:[#allocation2 + $0xc8] sm:$0xff]
    %v227 = vld [vmem:[#allocation2 + $0xd0] sm:$0xff]
    %v228 = vld [vmem:[#allocation2 + $0xd8] sm:$0xff]
    %v229 = vld [vmem:[#allocation2 + $0xe0] sm:$0xff]
    %v230 = vld [vmem:[#allocation2 + $0xe8] sm:$0xff]
    %v231 = vld [vmem:[#allocation2 + $0xf0] sm:$0xff]
    %v232 = vld [vmem:[#allocation2 + $0xf8] sm:$0xff]
    %v233 = vld [vmem:[%s4] sm:$0x3]
    %v235 = vperm.slane %v233, 0
    %v236 = vperm.slane %v233, 1
    %v271 = vunpack.c.l.b16 %v201
    %v272 = vunpack.c.h.b16 %v201
    %v273 = vunpack.c.l.b16 %v202
    %v274 = vunpack.c.h.b16 %v202
    %v275 = vunpack.c.l.b16 %v203
    %v276 = vunpack.c.h.b16 %v203
    %v277 = vunpack.c.l.b16 %v204
    %v278 = vunpack.c.h.b16 %v204
    %v279 = vunpack.c.l.b16 %v205
    %v280 = vunpack.c.h.b16 %v205
    %v281 = vunpack.c.l.b16 %v206
    %v282 = vunpack.c.h.b16 %v206
    %v283 = vunpack.c.l.b16 %v207
    %v284 = vunpack.c.h.b16 %v207
    %v285 = vunpack.c.l.b16 %v208
    %v286 = vunpack.c.h.b16 %v208
    %v287 = vunpack.c.l.b16 %v209
    %v288 = vunpack.c.h.b16 %v209
    %v289 = vunpack.c.l.b16 %v210
    %v290 = vunpack.c.h.b16 %v210
    %v291 = vunpack.c.l.b16 %v211
    %v292 = vunpack.c.h.b16 %v211
    %v293 = vunpack.c.l.b16 %v212
    %v294 = vunpack.c.h.b16 %v212
    %v295 = vunpack.c.l.b16 %v213
    %v296 = vunpack.c.h.b16 %v213
    %v297 = vunpack.c.l.b16 %v214
    %v298 = vunpack.c.h.b16 %v214
    %v299 = vunpack.c.l.b16 %v215
    %v300 = vunpack.c.h.b16 %v215
    %v301 = vunpack.c.l.b16 %v216
    %v302 = vunpack.c.h.b16 %v216
    %v303 = vunpack.c.l.b16 %v217
    %v304 = vunpack.c.h.b16 %v217
    %v305 = vunpack.c.l.b16 %v218
    %v306 = vunpack.c.h.b16 %v218
    %v307 = vunpack.c.l.b16 %v219
    %v308 = vunpack.c.h.b16 %v219
    %v309 = vunpack.c.l.b16 %v220
    %v310 = vunpack.c.h.b16 %v220
    %v311 = vunpack.c.l.b16 %v221
    %v312 = vunpack.c.h.b16 %v221
    %v313 = vunpack.c.l.b16 %v222
    %v314 = vunpack.c.h.b16 %v222
    %v315 = vunpack.c.l.b16 %v223
    %v316 = vunpack.c.h.b16 %v223
    %v317 = vunpack.c.l.b16 %v224
    %v318 = vunpack.c.h.b16 %v224
    %v319 = vunpack.c.l.b16 %v225
    %v320 = vunpack.c.h.b16 %v225
    %v321 = vunpack.c.l.b16 %v226
    %v322 = vunpack.c.h.b16 %v226
    %v323 = vunpack.c.l.b16 %v227
    %v324 = vunpack.c.h.b16 %v227
    %v325 = vunpack.c.l.b16 %v228
    %v326 = vunpack.c.h.b16 %v228
    %v327 = vunpack.c.l.b16 %v229
    %v328 = vunpack.c.h.b16 %v229
    %v329 = vunpack.c.l.b16 %v230
    %v330 = vunpack.c.h.b16 %v230
    %v331 = vunpack.c.l.b16 %v231
    %v332 = vunpack.c.h.b16 %v231
    %v333 = vunpack.c.l.b16 %v232
    %v334 = vunpack.c.h.b16 %v232
    %v335 = vpack.c.b16 %v273, %v271
    %v336 = vpack.c.b16 %v274, %v272
    %v337 = vpack.c.b16 %v277, %v275
    %v338 = vpack.c.b16 %v278, %v276
    %v339 = vpack.c.b16 %v281, %v279
    %v340 = vpack.c.b16 %v282, %v280
    %v341 = vpack.c.b16 %v285, %v283
    %v342 = vpack.c.b16 %v286, %v284
    %v343 = vpack.c.b16 %v289, %v287
    %v344 = vpack.c.b16 %v290, %v288
    %v345 = vpack.c.b16 %v293, %v291
    %v346 = vpack.c.b16 %v294, %v292
    %v347 = vpack.c.b16 %v297, %v295
    %v348 = vpack.c.b16 %v298, %v296
    %v349 = vpack.c.b16 %v301, %v299
    %v350 = vpack.c.b16 %v302, %v300
    %v351 = vpack.c.b16 %v305, %v303
    %v352 = vpack.c.b16 %v306, %v304
    %v353 = vpack.c.b16 %v309, %v307
    %v354 = vpack.c.b16 %v310, %v308
    %v355 = vpack.c.b16 %v313, %v311
    %v356 = vpack.c.b16 %v314, %v312
    %v357 = vpack.c.b16 %v317, %v315
    %v358 = vpack.c.b16 %v318, %v316
    %v359 = vpack.c.b16 %v321, %v319
    %v360 = vpack.c.b16 %v322, %v320
    %v361 = vpack.c.b16 %v325, %v323
    %v362 = vpack.c.b16 %v326, %v324
    %v363 = vpack.c.b16 %v329, %v327
    %v364 = vpack.c.b16 %v330, %v328
    %v365 = vpack.c.b16 %v333, %v331
    %v366 = vpack.c.b16 %v334, %v332
    %399 = vmatpush.bf16.msra.mxu0 %v349
    %400 = vmatpush.bf16.msra.mxu0 %v347
    %401 = vmatpush.bf16.msra.mxu0 %v345
    %402 = vmatpush.bf16.msra.mxu0 %v343
    %403 = vmatpush.bf16.msra.mxu0 %v341
    %404 = vmatpush.bf16.msra.mxu0 %v339
    %405 = vmatpush.bf16.msra.mxu0 %v337
    %406 = vmatpush.bf16.msra.mxu0 %v335
    %407 = vmatmul.bf16.gmra.mxu0 %v197
    %v408 = vpop.f32.mrf.mxu0
    %v409 = vadd.f32 %v235, %v408
    %v410 = vpop.f32.mrf.mxu0
    %v411 = vadd.f32 %v235, %v410
    %412 = vmatmul.bf16.gmra.mxu0 %v199
    %v413 = vpop.f32.mrf.mxu0
    %v414 = vadd.f32 %v235, %v413
    %v415 = vpop.f32.mrf.mxu0
    %v416 = vadd.f32 %v235, %v415
    %417 = vdwg.mxu0
    %418 = vmatpush.bf16.msra.mxu0 %v365
    %419 = vmatpush.bf16.msra.mxu0 %v363
    %420 = vmatpush.bf16.msra.mxu0 %v361
    %421 = vmatpush.bf16.msra.mxu0 %v359
    %422 = vmatpush.bf16.msra.mxu0 %v357
    %423 = vmatpush.bf16.msra.mxu0 %v355
    %424 = vmatpush.bf16.msra.mxu0 %v353
    %425 = vmatpush.bf16.msra.mxu0 %v351
    %426 = vmatmul.bf16.gmra.mxu0 %v198
    %v427 = vpop.f32.mrf.mxu0
    %v428 = vadd.f32 %v409, %v427
    %v429 = vpop.f32.mrf.mxu0
    %v430 = vadd.f32 %v411, %v429
    %431 = vmatmul.bf16.gmra.mxu0 %v200
    %v432 = vpop.f32.mrf.mxu0
    %v433 = vadd.f32 %v414, %v432
    %v434 = vpop.f32.mrf.mxu0
    %v435 = vadd.f32 %v416, %v434
    %436 = vdwg.mxu0
    %437 = vmatpush.bf16.msra.mxu0 %v350
    %438 = vmatpush.bf16.msra.mxu0 %v348
    %439 = vmatpush.bf16.msra.mxu0 %v346
    %440 = vmatpush.bf16.msra.mxu0 %v344
    %441 = vmatpush.bf16.msra.mxu0 %v342
    %442 = vmatpush.bf16.msra.mxu0 %v340
    %443 = vmatpush.bf16.msra.mxu0 %v338
    %444 = vmatpush.bf16.msra.mxu0 %v336
    %445 = vmatmul.bf16.gmra.mxu0 %v197
    %v446 = vpop.f32.mrf.mxu0
    %v447 = vadd.f32 %v236, %v446
    %v448 = vpop.f32.mrf.mxu0
    %v449 = vadd.f32 %v236, %v448
    %450 = vmatmul.bf16.gmra.mxu0 %v199
    %v451 = vpop.f32.mrf.mxu0
    %v452 = vadd.f32 %v236, %v451
    %v453 = vpop.f32.mrf.mxu0
    %v454 = vadd.f32 %v236, %v453
    %455 = vdwg.mxu0
    %456 = vmatpush.bf16.msra.mxu0 %v366
    %457 = vmatpush.bf16.msra.mxu0 %v364
    %458 = vmatpush.bf16.msra.mxu0 %v362
    %459 = vmatpush.bf16.msra.mxu0 %v360
    %460 = vmatpush.bf16.msra.mxu0 %v358
    %461 = vmatpush.bf16.msra.mxu0 %v356
    %462 = vmatpush.bf16.msra.mxu0 %v354
    %463 = vmatpush.bf16.msra.mxu0 %v352
    %464 = vmatmul.bf16.gmra.mxu0 %v198
    %v465 = vpop.f32.mrf.mxu0
    %v466 = vadd.f32 %v447, %v465
    %v467 = vpop.f32.mrf.mxu0
    %v468 = vadd.f32 %v449, %v467
    %469 = vmatmul.bf16.gmra.mxu0 %v200
    %v470 = vpop.f32.mrf.mxu0
    %v471 = vadd.f32 %v452, %v470
    %v472 = vpop.f32.mrf.mxu0
    %v473 = vadd.f32 %v454, %v472
    %474 = vdwg.mxu0
    %v475 = vmax.f32 %v428, 0.0
    %v476 = vmax.f32 %v466, 0.0
    %v477 = vmax.f32 %v430, 0.0
    %v478 = vmax.f32 %v468, 0.0
    %v479 = vmax.f32 %v433, 0.0
    %v480 = vmax.f32 %v471, 0.0
    %v481 = vmax.f32 %v435, 0.0
    %v482 = vmax.f32 %v473, 0.0
    %v483 = vpack.c.bf16 %v477, %v475
    %v484 = vpack.c.bf16 %v478, %v476
    %v485 = vpack.c.bf16 %v481, %v479
    %v486 = vpack.c.bf16 %v482, %v480
    %v487 = vld [vmem:[%s5] sm:$0xf]
    %v488 = vld [vmem:[%s5 + $0x4] sm:$0xf]
    %v489 = vld [vmem:[%s5 + $0x8] sm:$0xf]
    %v490 = vld [vmem:[%s5 + $0xc] sm:$0xf]
    %v491 = vld [vmem:[%s5 + $0x10] sm:$0xf]
    %v492 = vld [vmem:[%s5 + $0x14] sm:$0xf]
    %v493 = vld [vmem:[%s5 + $0x18] sm:$0xf]
    %v494 = vld [vmem:[%s5 + $0x1c] sm:$0xf]
    %v495 = vld [vmem:[%s5 + $0x20] sm:$0xf]
    %v496 = vld [vmem:[%s5 + $0x24] sm:$0xf]
    %v497 = vld [vmem:[%s5 + $0x28] sm:$0xf]
    %v498 = vld [vmem:[%s5 + $0x2c] sm:$0xf]
    %v499 = vld [vmem:[%s5 + $0x30] sm:$0xf]
    %v500 = vld [vmem:[%s5 + $0x34] sm:$0xf]
    %v501 = vld [vmem:[%s5 + $0x38] sm:$0xf]
    %v502 = vld [vmem:[%s5 + $0x3c] sm:$0xf]
    %v503 = vld [vmem:[%s5 + $0x40] sm:$0xf]
    %v504 = vld [vmem:[%s5 + $0x44] sm:$0xf]
    %v505 = vld [vmem:[%s5 + $0x48] sm:$0xf]
    %v506 = vld [vmem:[%s5 + $0x4c] sm:$0xf]
    %v507 = vld [vmem:[%s5 + $0x50] sm:$0xf]
    %v508 = vld [vmem:[%s5 + $0x54] sm:$0xf]
    %v509 = vld [vmem:[%s5 + $0x58] sm:$0xf]
    %v510 = vld [vmem:[%s5 + $0x5c] sm:$0xf]
    %v511 = vld [vmem:[%s5 + $0x60] sm:$0xf]
    %v512 = vld [vmem:[%s5 + $0x64] sm:$0xf]
    %v513 = vld [vmem:[%s5 + $0x68] sm:$0xf]
    %v514 = vld [vmem:[%s5 + $0x6c] sm:$0xf]
    %v515 = vld [vmem:[%s5 + $0x70] sm:$0xf]
    %v516 = vld [vmem:[%s5 + $0x74] sm:$0xf]
    %v517 = vld [vmem:[%s5 + $0x78] sm:$0xf]
    %v518 = vld [vmem:[%s5 + $0x7c] sm:$0xf]
    %v519 = vld [vmem:[%s6] sm:$0x1]
    %v521 = vperm.slane %v519, 0
    %v555 = vunpack.c.l.b16 %v487
    %v556 = vunpack.c.l.b16 %v488
    %v557 = vunpack.c.l.b16 %v489
    %v558 = vunpack.c.l.b16 %v490
    %v559 = vunpack.c.l.b16 %v491
    %v560 = vunpack.c.l.b16 %v492
    %v561 = vunpack.c.l.b16 %v493
    %v562 = vunpack.c.l.b16 %v494
    %v563 = vunpack.c.l.b16 %v495
    %v564 = vunpack.c.l.b16 %v496
    %v565 = vunpack.c.l.b16 %v497
    %v566 = vunpack.c.l.b16 %v498
    %v567 = vunpack.c.l.b16 %v499
    %v568 = vunpack.c.l.b16 %v500
    %v569 = vunpack.c.l.b16 %v501
    %v570 = vunpack.c.l.b16 %v502
    %v571 = vunpack.c.l.b16 %v503
    %v572 = vunpack.c.l.b16 %v504
    %v573 = vunpack.c.l.b16 %v505
    %v574 = vunpack.c.l.b16 %v506
    %v575 = vunpack.c.l.b16 %v507
    %v576 = vunpack.c.l.b16 %v508
    %v577 = vunpack.c.l.b16 %v509
    %v578 = vunpack.c.l.b16 %v510
    %v579 = vunpack.c.l.b16 %v511
    %v580 = vunpack.c.l.b16 %v512
    %v581 = vunpack.c.l.b16 %v513
    %v582 = vunpack.c.l.b16 %v514
    %v583 = vunpack.c.l.b16 %v515
    %v584 = vunpack.c.l.b16 %v516
    %v585 = vunpack.c.l.b16 %v517
    %v586 = vunpack.c.l.b16 %v518
    %v587 = vpack.c.b16 %v556, %v555
    %v588 = vpack.c.b16 %v558, %v557
    %v589 = vpack.c.b16 %v560, %v559
    %v590 = vpack.c.b16 %v562, %v561
    %v591 = vpack.c.b16 %v564, %v563
    %v592 = vpack.c.b16 %v566, %v565
    %v593 = vpack.c.b16 %v568, %v567
    %v594 = vpack.c.b16 %v570, %v569
    %v595 = vpack.c.b16 %v572, %v571
    %v596 = vpack.c.b16 %v574, %v573
    %v597 = vpack.c.b16 %v576, %v575
    %v598 = vpack.c.b16 %v578, %v577
    %v599 = vpack.c.b16 %v580, %v579
    %v600 = vpack.c.b16 %v582, %v581
    %v601 = vpack.c.b16 %v584, %v583
    %v602 = vpack.c.b16 %v586, %v585
    %619 = vmatpush.bf16.msra.mxu0 %v594
    %620 = vmatpush.bf16.msra.mxu0 %v593
    %621 = vmatpush.bf16.msra.mxu0 %v592
    %622 = vmatpush.bf16.msra.mxu0 %v591
    %623 = vmatpush.bf16.msra.mxu0 %v590
    %624 = vmatpush.bf16.msra.mxu0 %v589
    %625 = vmatpush.bf16.msra.mxu0 %v588
    %626 = vmatpush.bf16.msra.mxu0 %v587
    %627 = vmatmul.bf16.gmra.mxu0 %v483
    %v628 = vpop.f32.mrf.mxu0
    %v629 = vadd.f32 %v521, %v628
    %v630 = vpop.f32.mrf.mxu0
    %v631 = vadd.f32 %v521, %v630
    %632 = vmatmul.bf16.gmra.mxu0 %v485
    %v633 = vpop.f32.mrf.mxu0
    %v634 = vadd.f32 %v521, %v633
    %v635 = vpop.f32.mrf.mxu0
    %v636 = vadd.f32 %v521, %v635
    %637 = vdwg.mxu0
    %638 = vmatpush.bf16.msra.mxu0 %v602
    %639 = vmatpush.bf16.msra.mxu0 %v601
    %640 = vmatpush.bf16.msra.mxu0 %v600
    %641 = vmatpush.bf16.msra.mxu0 %v599
    %642 = vmatpush.bf16.msra.mxu0 %v598
    %643 = vmatpush.bf16.msra.mxu0 %v597
    %644 = vmatpush.bf16.msra.mxu0 %v596
    %645 = vmatpush.bf16.msra.mxu0 %v595
    %646 = vmatmul.bf16.gmra.mxu0 %v484
    %v647 = vpop.f32.mrf.mxu0
    %v648 = vadd.f32 %v629, %v647
    %v649 = vpop.f32.mrf.mxu0
    %v650 = vadd.f32 %v631, %v649
    %651 = vmatmul.bf16.gmra.mxu0 %v486
    %v652 = vpop.f32.mrf.mxu0
    %v653 = vadd.f32 %v634, %v652
    %v654 = vpop.f32.mrf.mxu0
    %v655 = vadd.f32 %v636, %v654
    %656 = vdwg.mxu0
    %vm657 = vcmask 523264
    %658 = vst.msk [vmem:[#allocation5] sm:$0xff] %vm657, %v648
    %659 = vst.msk [vmem:[#allocation5 + $0x8] sm:$0xff] %vm657, %v650
    %660 = vst.msk [vmem:[#allocation5 + $0x10] sm:$0xff] %vm657, %v653
    %661 = vst.msk [vmem:[#allocation5 + $0x18] sm:$0xff] %vm657, %v655
    // Predicated region
    $region34: #{tpu_custom_call.1} parent=1 // pred_check
      _
    $region35: #{tpu_custom_call.1} parent=1 // pred_check_branch
      %663 = sbr.rel (0) target = $region37
    $region36: #{tpu_custom_call.1} parent=1 // pred_region
      %665 = vsyncadd [#allocation4], 0
      %s666 = sshll.u32 [#allocation5], 4
      %s667 = int_to_ptr.vmem [resolvable:$true] %s666
      %s668 = sshll.u32 %s7, 4
      %s669 = int_to_ptr.hbm [resolvable:$true] %s668
      %674 = dma.vmem_to_hbm [thread:$0]  %s667, 512, %s669, [#allocation4], 128, 128, 8
    $region37: #{tpu_custom_call.1} parent=1 // pred_fallthru
      _
    // Predicated region
    $region38: #{tpu_custom_call.1} parent=1 // pred_check
      _
    $region39: #{tpu_custom_call.1} parent=1 // pred_check_branch
      %676 = sbr.rel (0) target = $region41
    $region40: #{tpu_custom_call.1} parent=1 // pred_region
      %678 = dma.done [#allocation4], 512
    $region41: #{tpu_custom_call.1} parent=1 // pred_fallthru
      _
    %679 = vsyncpa [#allocation3], 1
    %680 = vsyncpa [#allocation4], 1

</llo_original>
